<compile_context>
chip_gen: v5e
topology: v5e:2x2
jax: 0.10.0
libtpu: 0.0.40
codegen_flags: <defaults>
</compile_context>

<pallas_src>
import jax
import jax.numpy as jnp
from jax.experimental import pallas as pl
from jax.experimental.pallas import tpu as pltpu


def mlp_kernel(xt_ref, w1t_ref, b1t_ref, w2t_ref, b2t_ref, ot_ref):
    # hT = relu(W1T @ xT + b1T): bf16 operands (pre-cast in wrapper) -> MXU,
    # f32 accumulation; epilogue in f32 (correct/cheap on v5e, free on v6e/v7x).
    h = jnp.dot(w1t_ref[...], xt_ref[...], preferred_element_type=jnp.float32)
    h = jnp.maximum(h + b1t_ref[...], 0.0)

    # yT = W2T @ hT + b2T
    y = jnp.dot(w2t_ref[...], h.astype(jnp.bfloat16),
                preferred_element_type=jnp.float32)
    ot_ref[...] = (y + b2t_ref[...]).astype(ot_ref.dtype)


def net_forward(x, w1, b1, w2, b2, *, tile_b=1024):
    """Pallas forward pass for Net: relu(Linear(x)) -> Linear.

    x : (B, F) float32
    w1: (F, H)  b1: (1, H)     (weights already transposed to (in, out))
    w2: (H, O)  b2: (1, O)
    returns (B, O) float32
    """
    B, F = x.shape
    H = w1.shape[1]
    O = w2.shape[1]

    # Batch rides the lane axis -> the batch tile must be a multiple of 128.
    # Default is large (1024) so per-grid-step overhead amortizes; it is capped at
    # the 128-padded batch so tiny batches stay a single grid step.
    tb = max(128, (int(tile_b) // 128) * 128)
    padded_min = ((B + 127) // 128) * 128
    tb = min(tb, padded_min)
    padded_b = ((B + tb - 1) // tb) * tb
    num_tiles = padded_b // tb

    # One-time host-side layout + dtype prep: transpose to (feature, batch) and
    # pre-cast matmul operands to bf16 (MXU-native; halves streamed DMA bytes).
    xt = jnp.pad(x, ((0, padded_b - B), (0, 0))).T.astype(jnp.bfloat16)   # (F, Bp)
    w1t = w1.T.astype(jnp.bfloat16)                                       # (H, F)
    w2t = w2.T.astype(jnp.bfloat16)                                       # (O, H)
    b1t = b1.reshape(H, 1).astype(jnp.float32)                            # (H, 1)
    b2t = b2.reshape(O, 1).astype(jnp.float32)                            # (O, 1)

    flops = 2 * padded_b * (F * H + H * O)
    bytes_accessed = (2 * padded_b * F            # bf16 xT stream
                      + 2 * (F * H + H * O)       # bf16 weights (resident)
                      + 4 * (H + O)               # f32 biases
                      + 4 * padded_b * O)         # f32 output

    out_t = pl.pallas_call(
        mlp_kernel,
        out_shape=jax.ShapeDtypeStruct((O, padded_b), jnp.float32),
        grid=(num_tiles,),
        in_specs=[
            # xT streamed one lane-dense batch tile per grid step (pipelined DMA).
            pl.BlockSpec((F, tb), lambda i: (0, i)),
            # weights / biases: constant index_map -> VMEM-resident across the grid.
            pl.BlockSpec((H, F), lambda i: (0, 0)),
            pl.BlockSpec((H, 1), lambda i: (0, 0)),
            pl.BlockSpec((O, H), lambda i: (0, 0)),
            pl.BlockSpec((O, 1), lambda i: (0, 0)),
        ],
        # Lane-dense output tile (last dim = tb, a multiple of 128) -> unmasked vst.
        out_specs=pl.BlockSpec((O, tb), lambda i: (0, i)),
        compiler_params=pltpu.CompilerParams(
            # Independent batch tiles -> shard grid points across TensorCores (v7x).
            dimension_semantics=("parallel",),
        ),
        cost_estimate=pl.CostEstimate(
            flops=flops, transcendentals=0, bytes_accessed=bytes_accessed),
    )(xt, w1t, b1t, w2t, b2t)

    # Back to (B, O) row-major; padded batch columns are dropped.
    return out_t[:, :B].T


def init_linear(key, in_features, out_features):
    """Deterministic init mimicking torch.nn.Linear default (uniform +-1/sqrt(fan_in)).
    Returns weight already transposed to (in_features, out_features)."""
    kw, kb = jax.random.split(key)
    bound = 1.0 / jnp.sqrt(jnp.float32(in_features))
    w = jax.random.uniform(kw, (in_features, out_features), jnp.float32,
                           minval=-bound, maxval=bound)
    b = jax.random.uniform(kb, (1, out_features), jnp.float32,
                           minval=-bound, maxval=bound)
    return w, b


if __name__ == "__main__":
    # Small shapes consistent with Net(n_feature, n_hidden, n_output); batch=100
    # mirrors the linspace(-1, 1, 100) input of the original script.  At this size
    # the batch pads to one 128-wide lane tile -> a single grid step (no Pallas
    # per-step overhead wasted on sub-microsecond compute).
    batch, n_feature, n_hidden, n_output = 100, 4, 32, 4

    key = jax.random.PRNGKey(0)
    kx, k1, k2 = jax.random.split(key, 3)

    x = jax.random.uniform(kx, (batch, n_feature), jnp.float32,
                           minval=-1.0, maxval=1.0)
    w1, b1 = init_linear(k1, n_feature, n_hidden)
    w2, b2 = init_linear(k2, n_hidden, n_output)

    y = net_forward(x, w1, b1, w2, b2)
    jax.block_until_ready(y)
    assert y.shape == (batch, n_output)

    # Matched-precision reference (same bf16 matmul operands, f32 accumulate).
    xb = x.astype(jnp.bfloat16)
    w1b = w1.astype(jnp.bfloat16)
    w2b = w2.astype(jnp.bfloat16)
    h_ref = jnp.maximum(
        jnp.dot(xb, w1b, preferred_element_type=jnp.float32) + b1, 0.0)
    ref = jnp.dot(h_ref.astype(jnp.bfloat16), w2b,
                  preferred_element_type=jnp.float32) + b2
    assert jnp.allclose(y, ref, atol=1e-2, rtol=1e-2)

    # Loose sanity check against pure-f32 math (bf16 rounding tolerance).
    ref_f32 = jnp.maximum(x @ w1 + b1, 0.0) @ w2 + b2
    assert jnp.allclose(y, ref_f32, atol=5e-2, rtol=5e-2)

    print("KERNEL_OK")
</pallas_src>

<mosaic_0001>
module attributes {stable_mosaic.version = 11 : i64} {
  func.func @mlp_kernel(%arg0: i32, %arg1: memref<4x128xbf16, #tpu.memory_space<vmem>>, %arg2: memref<32x4xbf16, #tpu.memory_space<vmem>>, %arg3: memref<32x1xf32, #tpu.memory_space<vmem>>, %arg4: memref<4x32xbf16, #tpu.memory_space<vmem>>, %arg5: memref<4x1xf32, #tpu.memory_space<vmem>>, %arg6: memref<4x128xf32, #tpu.memory_space<vmem>>) attributes {dimension_semantics = [#tpu.dimension_semantics<parallel>], iteration_bounds = array<i64: 1>, scalar_prefetch = 0 : i64, scratch_operands = 0 : i64, tpu.core_type = #tpu.core_type<tc>, window_params = [{transform_indices = @transform_0, window_bounds = array<i64: 4, 128>}, {pipeline_mode = #tpu.pipeline_mode<synchronous>, transform_indices = @transform_1, window_bounds = array<i64: 32, 4>}, {pipeline_mode = #tpu.pipeline_mode<synchronous>, transform_indices = @transform_2, window_bounds = array<i64: 32, 1>}, {pipeline_mode = #tpu.pipeline_mode<synchronous>, transform_indices = @transform_3, window_bounds = array<i64: 4, 32>}, {pipeline_mode = #tpu.pipeline_mode<synchronous>, transform_indices = @transform_4, window_bounds = array<i64: 4, 1>}, {transform_indices = @transform_5, window_bounds = array<i64: 4, 128>}]} {
    %c0 = arith.constant 0 : index
    %c0_0 = arith.constant 0 : index
    %0 = vector.load %arg2[%c0, %c0_0] : memref<32x4xbf16, #tpu.memory_space<vmem>>, vector<32x4xbf16>
    %c0_1 = arith.constant 0 : index
    %c0_2 = arith.constant 0 : index
    %1 = vector.load %arg1[%c0_1, %c0_2] : memref<4x128xbf16, #tpu.memory_space<vmem>>, vector<4x128xbf16>
    %cst = arith.constant dense<0.000000e+00> : vector<32x128xf32>
    %2 = tpu.matmul %0, %1, %cst {dimension_numbers = #tpu.dot_dimension_numbers<[1], [0], [0], [1], [0, 0, 1, 1], [], []>} : vector<32x4xbf16>, vector<4x128xbf16>, vector<32x128xf32> -> vector<32x128xf32>
    %c0_3 = arith.constant 0 : index
    %c0_4 = arith.constant 0 : index
    %3 = vector.load %arg3[%c0_3, %c0_4] : memref<32x1xf32, #tpu.memory_space<vmem>>, vector<32x1xf32>
    %4 = vector.broadcast %3 : vector<32x1xf32> to vector<32x128xf32>
    %5 = arith.addf %2, %4 : vector<32x128xf32>
    %cst_5 = arith.constant 0.000000e+00 : f32
    %6 = vector.broadcast %cst_5 : f32 to vector<32x128xf32>
    %7 = arith.maximumf %5, %6 : vector<32x128xf32>
    %c0_6 = arith.constant 0 : index
    %c0_7 = arith.constant 0 : index
    %8 = vector.load %arg4[%c0_6, %c0_7] : memref<4x32xbf16, #tpu.memory_space<vmem>>, vector<4x32xbf16>
    %9 = arith.truncf %7 : vector<32x128xf32> to vector<32x128xbf16>
    %cst_8 = arith.constant dense<0.000000e+00> : vector<4x128xf32>
    %10 = tpu.matmul %8, %9, %cst_8 {dimension_numbers = #tpu.dot_dimension_numbers<[1], [0], [0], [1], [0, 0, 1, 1], [], []>} : vector<4x32xbf16>, vector<32x128xbf16>, vector<4x128xf32> -> vector<4x128xf32>
    %c0_9 = arith.constant 0 : index
    %c0_10 = arith.constant 0 : index
    %11 = vector.load %arg5[%c0_9, %c0_10] : memref<4x1xf32, #tpu.memory_space<vmem>>, vector<4x1xf32>
    %12 = vector.broadcast %11 : vector<4x1xf32> to vector<4x128xf32>
    %13 = arith.addf %10, %12 : vector<4x128xf32>
    %c0_11 = arith.constant 0 : index
    %c0_12 = arith.constant 0 : index
    %14 = vector.load %arg6[%c0_11, %c0_12] : memref<4x128xf32, #tpu.memory_space<vmem>>, vector<4x128xf32>
    tpu.vector_store %arg6[%c0_11, %c0_12], %13 {strides = array<i32>} : memref<4x128xf32, #tpu.memory_space<vmem>>, vector<4x128xf32>,
    return
  }
  func.func @transform_0(%arg0: i32) -> (i32, i32) {
    %c0_i32 = arith.constant 0 : i32
    %c0_i32_0 = arith.constant 0 : i32
    return %c0_i32, %arg0 : i32, i32
  }
  func.func @transform_1(%arg0: i32) -> (i32, i32) {
    %c0_i32 = arith.constant 0 : i32
    %c0_i32_0 = arith.constant 0 : i32
    %c0_i32_1 = arith.constant 0 : i32
    return %c0_i32, %c0_i32_0 : i32, i32
  }
  func.func @transform_2(%arg0: i32) -> (i32, i32) {
    %c0_i32 = arith.constant 0 : i32
    %c0_i32_0 = arith.constant 0 : i32
    %c0_i32_1 = arith.constant 0 : i32
    return %c0_i32, %c0_i32_0 : i32, i32
  }
  func.func @transform_3(%arg0: i32) -> (i32, i32) {
    %c0_i32 = arith.constant 0 : i32
    %c0_i32_0 = arith.constant 0 : i32
    %c0_i32_1 = arith.constant 0 : i32
    return %c0_i32, %c0_i32_0 : i32, i32
  }
  func.func @transform_4(%arg0: i32) -> (i32, i32) {
    %c0_i32 = arith.constant 0 : i32
    %c0_i32_0 = arith.constant 0 : i32
    %c0_i32_1 = arith.constant 0 : i32
    return %c0_i32, %c0_i32_0 : i32, i32
  }
  func.func @transform_5(%arg0: i32) -> (i32, i32) {
    %c0_i32 = arith.constant 0 : i32
    %c0_i32_0 = arith.constant 0 : i32
    return %c0_i32, %arg0 : i32, i32
  }
}

</mosaic_0001>

<llo_original>
// kernel: tpu_custom_call.1
$region0: #{tpu_custom_call.1}
  #allocation0 [shape = 'u32[]', space=smem, size = 0x4, offset = 0x4, fixed_abs, tag = 'smem constant byte address 0x4 - core index']
  #allocation1 [shape = 'u32[72,128]{1,0:T(1,128)}', space=vmem, size = 0x9000, scoped, tag = 'internal scratch']
  %s0 = inlined_call_operand.vmem [shape: bf16[4,128], index: 0, kind: input, shape index: {}]
  %s1 = inlined_call_operand.vmem [shape: bf16[32,4], index: 1, kind: input, shape index: {}]
  %s2 = inlined_call_operand.vmem [shape: f32[32,1], index: 2, kind: input, shape index: {}]
  %s3 = inlined_call_operand.vmem [shape: bf16[4,32], index: 3, kind: input, shape index: {}]
  %s4 = inlined_call_operand.vmem [shape: f32[4,1], index: 4, kind: input, shape index: {}]
  %s5 = inlined_call_operand.hbm [shape: f32[4,128], index: 5, kind: output, shape index: {}]
  %s6 = sld [smem:[#allocation0]]
  $region30: #{tpu_custom_call.1} parent=0
    _
  %s8 = ssub.s32 1, %s6
  %s9 = scalar_select 0, %s8, %s6
  $region1: #{tpu_custom_call.1} parent=0
    #allocation2 [shape = 'u8[2048]{0}', space=vmem, size = 0x800, scoped, tag = 'output window, operand 0, single buffered']
    #allocation3 [shape = 's32[1]{0}', space=sflag, size = 0x4, scoped, tag = 'scoped memory for tpu_custom_call.1']
    %10 = vsyncpa [#allocation3], 0
    // Predicated region
    $region2: #{tpu_custom_call.1} parent=1 // pred_check
      _
    $region3: #{tpu_custom_call.1} parent=1 // pred_check_branch
      %12 = sbr.rel (0) target = $region5
    $region4: #{tpu_custom_call.1} parent=1 // pred_region
      _
    $region5: #{tpu_custom_call.1} parent=1 // pred_fallthru
      _
    // Predicated region
    $region6: #{tpu_custom_call.1} parent=1 // pred_check
      _
    $region7: #{tpu_custom_call.1} parent=1 // pred_check_branch
      %14 = sbr.rel (0) target = $region9
    $region8: #{tpu_custom_call.1} parent=1 // pred_region
      _
    $region9: #{tpu_custom_call.1} parent=1 // pred_fallthru
      _
    // Predicated region
    $region10: #{tpu_custom_call.1} parent=1 // pred_check
      _
    $region11: #{tpu_custom_call.1} parent=1 // pred_check_branch
      %16 = sbr.rel (0) target = $region13
    $region12: #{tpu_custom_call.1} parent=1 // pred_region
      _
    $region13: #{tpu_custom_call.1} parent=1 // pred_fallthru
      _
    // Predicated region
    $region14: #{tpu_custom_call.1} parent=1 // pred_check
      _
    $region15: #{tpu_custom_call.1} parent=1 // pred_check_branch
      %18 = sbr.rel (0) target = $region17
    $region16: #{tpu_custom_call.1} parent=1 // pred_region
      _
    $region17: #{tpu_custom_call.1} parent=1 // pred_fallthru
      _
    // Predicated region
    $region18: #{tpu_custom_call.1} parent=1 // pred_check
      _
    $region19: #{tpu_custom_call.1} parent=1 // pred_check_branch
      %20 = sbr.rel (0) target = $region21
    $region20: #{tpu_custom_call.1} parent=1 // pred_region
      _
    $region21: #{tpu_custom_call.1} parent=1 // pred_fallthru
      _
    %v22 = vld [vmem:[%s1] sm:$0xf]
    %v23 = vld [vmem:[%s1 + $0x4] sm:$0xf]
    %v24 = vld [vmem:[%s1 + $0x8] sm:$0xf]
    %v25 = vld [vmem:[%s1 + $0xc] sm:$0xf]
    %v26 = vld [vmem:[%s0] sm:$0x3]
    %v27 = vld [vmem:[%s2] sm:$0xff]
    %v28 = vld [vmem:[%s2 + $0x8] sm:$0xff]
    %v29 = vld [vmem:[%s2 + $0x10] sm:$0xff]
    %v30 = vld [vmem:[%s2 + $0x18] sm:$0xff]
    %32 = vset.pattern.permute.xlu0 0
    %33 = vperm.xlu0 %32, %v27
    %v34 = vpop.permute.xlu0 %33
    %37 = vset.pattern.permute.xlu0 0
    %38 = vperm.xlu0 %37, %v28
    %v39 = vpop.permute.xlu0 %38
    %42 = vset.pattern.permute.xlu0 0
    %43 = vperm.xlu0 %42, %v29
    %v44 = vpop.permute.xlu0 %43
    %47 = vset.pattern.permute.xlu0 0
    %48 = vperm.xlu0 %47, %v30
    %v49 = vpop.permute.xlu0 %48
    %v55 = vunpack.c.l.b16 %v22
    %v56 = vunpack.c.l.b16 %v23
    %v57 = vunpack.c.l.b16 %v24
    %v58 = vunpack.c.l.b16 %v25
    %v59 = vpack.c.b16 %v56, %v55
    %v60 = vpack.c.b16 %v58, %v57
    %vm61 = vcmask 31744
    %v63 = vsel %vm61, %v59, 0
    %v66 = vsel %vm61, %v60, 0
    %vm68 = vcmask 1041408
    %v70 = vsel %vm68, %v26, 0
    %72 = vmatpush.bf16.msra.mxu0 0
    %73 = vmatpush.bf16.msra.mxu0 0
    %74 = vmatpush.bf16.msra.mxu0 0
    %75 = vmatpush.bf16.msra.mxu0 0
    %76 = vmatpush.bf16.msra.mxu0 0
    %77 = vmatpush.bf16.msra.mxu0 0
    %78 = vmatpush.bf16.msra.mxu0 0
    %79 = vmatpush.bf16.msra.mxu0 %v70
    %80 = vmatmul.bf16.gmra.mxu0 %v63
    %v81 = vpop.f32.mrf.mxu0
    %v82 = vadd.f32 %v34, %v81
    %v83 = vpop.f32.mrf.mxu0
    %v84 = vadd.f32 %v39, %v83
    %85 = vmatmul.bf16.gmra.mxu0 %v66
    %v86 = vpop.f32.mrf.mxu0
    %v87 = vadd.f32 %v44, %v86
    %v88 = vpop.f32.mrf.mxu0
    %v89 = vadd.f32 %v49, %v88
    %90 = vdwg.mxu0
    %v91 = vmax.f32 %v82, 0.0
    %v92 = vmax.f32 %v84, 0.0
    %v93 = vmax.f32 %v87, 0.0
    %v94 = vmax.f32 %v89, 0.0
    %v95 = vld [vmem:[%s3] sm:$0x3]
    %v96 = vpack.c.bf16 %v92, %v91
    %v97 = vpack.c.bf16 %v94, %v93
    %v98 = vld [vmem:[%s4] sm:$0xf]
    %100 = vset.pattern.permute.xlu0 0
    %101 = vperm.xlu0 %100, %v98
    %v102 = vpop.permute.xlu0 %101
    %vm104 = vcmask 261120
    %v106 = vsel %vm104, %v95, 0
    %108 = vmatpush.bf16.msra.mxu0 0
    %109 = vmatpush.bf16.msra.mxu0 0
    %110 = vmatpush.bf16.msra.mxu0 0
    %111 = vmatpush.bf16.msra.mxu0 0
    %112 = vmatpush.bf16.msra.mxu0 0
    %113 = vmatpush.bf16.msra.mxu0 0
    %114 = vmatpush.bf16.msra.mxu0 %v97
    %115 = vmatpush.bf16.msra.mxu0 %v96
    %116 = vmatmul.bf16.gmra.mxu0 %v106
    %v117 = vpop.f32.mrf.mxu0
    %v118 = vadd.f32 %v102, %v117
    %v119 = vpop.f32.mrf.mxu0
    %120 = vdwg.mxu0
    %121 = vst [vmem:[#allocation2] sm:$0xf] %v118
    // Predicated region
    $region22: #{tpu_custom_call.1} parent=1 // pred_check
      _
    $region23: #{tpu_custom_call.1} parent=1 // pred_check_branch
      %123 = sbr.rel (0) target = $region25
    $region24: #{tpu_custom_call.1} parent=1 // pred_region
      %125 = vsyncadd [#allocation3], 0
      %s127 = sshll.u32 [#allocation2], 4
      %s128 = int_to_ptr.vmem [resolvable:$true] %s127
      %s129 = sshll.u32 %s5, 4
      %s130 = int_to_ptr.hbm [resolvable:$true] %s129
      %132 = dma.vmem_to_hbm [thread:$0]  %s128, 64, %s130, [#allocation3]
    $region25: #{tpu_custom_call.1} parent=1 // pred_fallthru
      _
    // Predicated region
    $region26: #{tpu_custom_call.1} parent=1 // pred_check
      _
    $region27: #{tpu_custom_call.1} parent=1 // pred_check_branch
      %134 = sbr.rel (0) target = $region29
    $region28: #{tpu_custom_call.1} parent=1 // pred_region
      %136 = dma.done [#allocation3], 64
    $region29: #{tpu_custom_call.1} parent=1 // pred_fallthru
      _
    %137 = vsyncpa [#allocation3], 1

</llo_original>
